<compile_context>
chip_gen: v7x
topology: tpu7x:2x2x1
jax: 0.10.0
libtpu: 0.0.40
codegen_flags: <defaults>
</compile_context>

<pallas_src>
import math

import jax
import jax.numpy as jnp
from jax import lax
from jax.experimental import pallas as pl
from jax.experimental.pallas import tpu as pltpu

_LANE = 128
_VMEM_LIMIT = 48 * 1024 * 1024       # scoped VMEM limit handed to Mosaic (safe on v5e/v6e/v7x)
_VMEM_BUDGET = 36 * 1024 * 1024      # what we let the double-buffered blocks use


# ----------------------------- Pallas kernels -------------------------------

def _conv_relu_stats_kernel(x_ref, w_ref, y_ref, stats_ref):
    """Fused conv-as-matmul (bf16 operands, f32 MXU accumulate) + ReLU.

    Stores the activation tile as bf16 (halves the 3x M*C HBM traffic of the
    intermediate) and emits per-tile per-channel partial sums / sums-of-squares
    computed from the f32 accumulator (so the batch statistics do not see the
    bf16 rounding of the stored intermediate).  No cross-step accumulation on
    the output -> the row-grid axis stays 'parallel' (megacore friendly)."""
    y = jnp.dot(x_ref[...], w_ref[...], preferred_element_type=jnp.float32)
    y = jnp.maximum(y, 0.0)                                    # ReLU
    y_ref[...] = y.astype(y_ref.dtype)                         # bf16 intermediate

    s = jnp.sum(y, axis=0, keepdims=True)                      # (1, Cp)
    ss = jnp.sum(y * y, axis=0, keepdims=True)                 # (1, Cp)
    stats_ref[...] = jnp.concatenate([s, ss], axis=0)[None]    # (1, 2, Cp)


def _bn_apply_kernel(y_ref, scale_ref, shift_ref, o_ref):
    """Apply the batch-norm affine normalization: upcast, y*scale + shift in f32."""
    y = y_ref[...].astype(jnp.float32)
    o_ref[...] = (y * scale_ref[...] + shift_ref[...]).astype(o_ref.dtype)


# ------------------------------- glue / wrapper ------------------------------

def _round_up(x, m):
    return ((x + m - 1) // m) * m


def _choose_tm(Kp, Cp, tm_max=512, tm_min=128):
    """Largest row tile whose (double-buffered) blocks fit the VMEM budget."""
    tm = tm_max
    while tm > tm_min:
        need = 2 * (tm * Kp * 2      # bf16 x block
                    + Kp * Cp * 2    # bf16 weight block
                    + tm * Cp * 2    # bf16 y block
                    + 2 * Cp * 4)    # f32 stats block
        if need <= _VMEM_BUDGET:
            break
        tm //= 2
    return tm


def _im2col_nhwc(x_nhwc, k, padding, stride):
    # TODO(synk): for kernel_size>1 pull the im2col gather into the Pallas
    # kernel (overlapping-window index_map / manual DMA from an NHWC HBM ref)
    # to avoid the k^2 duplication of HBM traffic done here in XLA.
    N, H, W, C = x_nhwc.shape
    Ho = (H + 2 * padding - k) // stride + 1
    Wo = (W + 2 * padding - k) // stride + 1
    if k == 1 and padding == 0 and stride == 1:
        return x_nhwc.reshape(N * H * W, C), Ho, Wo
    xp = jnp.pad(x_nhwc, ((0, 0), (padding, padding), (padding, padding), (0, 0)))
    cols = []
    for di in range(k):
        for dj in range(k):
            cols.append(xp[:, di:di + stride * Ho:stride, dj:dj + stride * Wo:stride, :])
    cols = jnp.concatenate(cols, axis=-1)                       # (N, Ho, Wo, k*k*C)
    return cols.reshape(N * Ho * Wo, k * k * C), Ho, Wo


def convrelubn_forward(x_nchw, weight_oihw, gamma, beta, *,
                       kernel_size=1, padding=0, stride=1,
                       eps=1e-5, tm=None):
    """bn(relu(conv(x))) -- BatchNorm2d in training mode (batch statistics,
    biased variance), matching the PyTorch module's forward."""
    x_nchw = x_nchw.astype(jnp.float32)
    N, Cin, H, W = x_nchw.shape
    Cout = weight_oihw.shape[0]
    k = kernel_size

    # NCHW -> NHWC, then im2col (pure data movement; hot path stays in Pallas).
    x_nhwc = jnp.transpose(x_nchw, (0, 2, 3, 1))
    x_cols, Ho, Wo = _im2col_nhwc(x_nhwc, k, padding, stride)   # (M, K) f32
    M, K = x_cols.shape

    # Weight (Cout, Cin, kh, kw) -> (kh*kw*Cin, Cout) matching im2col ordering.
    w_mat = jnp.transpose(weight_oihw.astype(jnp.float32), (2, 3, 1, 0)).reshape(K, Cout)

    # Zero-pad K and Cout up to lane multiples (128).  Numerically free here:
    # no conv bias, padded weight rows/cols are zero -> padded outputs are
    # exactly zero and relu(0) = 0, so padded rows/channels add nothing to the
    # batch statistics.
    Kp = _round_up(K, _LANE)
    Cp = _round_up(Cout, _LANE)
    if tm is None:
        tm = _choose_tm(Kp, Cp)
    Mp = pl.cdiv(M, tm) * tm
    n_tiles = Mp // tm

    x_cols = jnp.pad(x_cols, ((0, Mp - M), (0, Kp - K))).astype(jnp.bfloat16)
    w_mat = jnp.pad(w_mat, ((0, Kp - K), (0, Cp - Cout))).astype(jnp.bfloat16)

    # --- pass 1: conv (matmul) + relu + per-tile partial batch statistics ----
    y_pad, stats = pl.pallas_call(
        _conv_relu_stats_kernel,
        out_shape=(jax.ShapeDtypeStruct((Mp, Cp), jnp.bfloat16),
                   jax.ShapeDtypeStruct((n_tiles, 2, Cp), jnp.float32)),
        grid_spec=pltpu.PrefetchScalarGridSpec(
            num_scalar_prefetch=0,
            grid=(n_tiles,),
            in_specs=[pl.BlockSpec((tm, Kp), lambda i: (i, 0)),
                      pl.BlockSpec((Kp, Cp), lambda i: (0, 0))],
            out_specs=[pl.BlockSpec((tm, Cp), lambda i: (i, 0)),
                       pl.BlockSpec((1, 2, Cp), lambda i: (i, 0, 0))],
        ),
        compiler_params=pltpu.CompilerParams(
            dimension_semantics=("parallel",),
            vmem_limit_bytes=_VMEM_LIMIT),
    )(x_cols, w_mat)

    # Tiny per-channel scalar math: reduce partials, fold BN into scale/shift.
    totals = jnp.sum(stats, axis=0)                             # (2, Cp)
    count = jnp.float32(M)                                      # padded rows contribute 0
    mean = totals[0] / count
    # biased variance (PyTorch BN training); clamp against cancellation.
    var = jnp.maximum(totals[1] / count - mean * mean, 0.0)
    inv_std = lax.rsqrt(var + eps)
    gamma_p = jnp.pad(gamma.astype(jnp.float32), (0, Cp - Cout))
    beta_p = jnp.pad(beta.astype(jnp.float32), (0, Cp - Cout))
    scale = (gamma_p * inv_std).reshape(1, Cp)
    shift = (beta_p - mean * gamma_p * inv_std).reshape(1, Cp)

    # --- pass 2: apply batch-norm normalization (bf16 in, f32 out) -----------
    out_pad = pl.pallas_call(
        _bn_apply_kernel,
        out_shape=jax.ShapeDtypeStruct((Mp, Cp), jnp.float32),
        grid_spec=pltpu.PrefetchScalarGridSpec(
            num_scalar_prefetch=0,
            grid=(n_tiles,),
            in_specs=[pl.BlockSpec((tm, Cp), lambda i: (i, 0)),
                      pl.BlockSpec((1, Cp), lambda i: (0, 0)),
                      pl.BlockSpec((1, Cp), lambda i: (0, 0))],
            out_specs=pl.BlockSpec((tm, Cp), lambda i: (i, 0)),
        ),
        compiler_params=pltpu.CompilerParams(
            dimension_semantics=("parallel",),
            vmem_limit_bytes=_VMEM_LIMIT),
    )(y_pad, scale, shift)

    out = out_pad[:M, :Cout].reshape(N, Ho, Wo, Cout)
    return jnp.transpose(out, (0, 3, 1, 2))                     # back to NCHW


def _reference(x_nchw, weight_oihw, gamma, beta, *, kernel_size, padding, stride, eps=1e-5):
    y = lax.conv_general_dilated(
        x_nchw, weight_oihw, (stride, stride),
        [(padding, padding), (padding, padding)],
        dimension_numbers=("NCHW", "OIHW", "NCHW"))
    y = jnp.maximum(y, 0.0)
    mean = y.mean(axis=(0, 2, 3), keepdims=True)
    var = y.var(axis=(0, 2, 3), keepdims=True)                  # biased
    return (y - mean) / jnp.sqrt(var + eps) * gamma.reshape(1, -1, 1, 1) + beta.reshape(1, -1, 1, 1)


if __name__ == "__main__":
    def check(N, Cin, H, W, Cout, ksz, pad, stride, seed_key):
        kx, kw, kg, kb = jax.random.split(seed_key, 4)
        x = jax.random.normal(kx, (N, Cin, H, W), dtype=jnp.float32)
        fan_in = Cin * ksz * ksz
        weight = jax.random.normal(kw, (Cout, Cin, ksz, ksz), dtype=jnp.float32) * math.sqrt(2.0 / fan_in)
        gamma = jax.random.uniform(kg, (Cout,), dtype=jnp.float32, minval=0.5, maxval=1.5)
        beta = 0.1 * jax.random.normal(kb, (Cout,), dtype=jnp.float32)

        out = convrelubn_forward(x, weight, gamma, beta,
                                 kernel_size=ksz, padding=pad, stride=stride)
        out = jax.block_until_ready(out)

        # Reference on bf16-rounded operands (the kernel feeds bf16 to the MXU);
        # remaining deltas come from the bf16 activation intermediate.
        x_q = x.astype(jnp.bfloat16).astype(jnp.float32)
        w_q = weight.astype(jnp.bfloat16).astype(jnp.float32)
        ref = _reference(x_q, w_q, gamma, beta, kernel_size=ksz, padding=pad, stride=stride)

        Ho = (H + 2 * pad - ksz) // stride + 1
        Wo = (W + 2 * pad - ksz) // stride + 1
        assert out.shape == ref.shape == (N, Cout, Ho, Wo)
        assert jnp.allclose(out, ref, atol=5e-2, rtol=5e-2), \
            float(jnp.max(jnp.abs(out - ref)))

    key = jax.random.PRNGKey(0)
    k1, k2 = jax.random.split(key)
    # 1x1 conv (module defaults), small shapes.
    check(2, 4, 16, 16, 8, 1, 0, 1, k1)
    # 3x3 conv with padding=1 (exercises the im2col path).
    check(2, 4, 16, 16, 8, 3, 1, 1, k2)

    print("KERNEL_OK")
</pallas_src>

<mosaic_0001>
module attributes {stable_mosaic.version = 11 : i64} {
  func.func @_conv_relu_stats_kernel(%arg0: i32, %arg1: memref<512x128xbf16, #tpu.memory_space<vmem>>, %arg2: memref<128x128xbf16, #tpu.memory_space<vmem>>, %arg3: memref<512x128xbf16, #tpu.memory_space<vmem>>, %arg4: memref<1x2x128xf32, #tpu.memory_space<vmem>>) attributes {dimension_semantics = [#tpu.dimension_semantics<parallel>], iteration_bounds = array<i64: 1>, scalar_prefetch = 0 : i64, scratch_operands = 0 : i64, tpu.core_type = #tpu.core_type<tc>, window_params = [{transform_indices = @transform_0, window_bounds = array<i64: 512, 128>}, {pipeline_mode = #tpu.pipeline_mode<synchronous>, transform_indices = @transform_1, window_bounds = array<i64: 128, 128>}, {transform_indices = @transform_2, window_bounds = array<i64: 512, 128>}, {transform_indices = @transform_3, window_bounds = array<i64: 1, 2, 128>}]} {
    %c0 = arith.constant 0 : index
    %c0_0 = arith.constant 0 : index
    %0 = vector.load %arg1[%c0, %c0_0] : memref<512x128xbf16, #tpu.memory_space<vmem>>, vector<512x128xbf16>
    %c0_1 = arith.constant 0 : index
    %c0_2 = arith.constant 0 : index
    %1 = vector.load %arg2[%c0_1, %c0_2] : memref<128x128xbf16, #tpu.memory_space<vmem>>, vector<128x128xbf16>
    %cst = arith.constant dense<0.000000e+00> : vector<512x128xf32>
    %2 = tpu.matmul %0, %1, %cst {dimension_numbers = #tpu.dot_dimension_numbers<[1], [0], [0], [1], [0, 0, 1, 1], [], []>} : vector<512x128xbf16>, vector<128x128xbf16>, vector<512x128xf32> -> vector<512x128xf32>
    %cst_3 = arith.constant 0.000000e+00 : f32
    %3 = vector.broadcast %cst_3 : f32 to vector<512x128xf32>
    %4 = arith.maximumf %2, %3 : vector<512x128xf32>
    %5 = arith.truncf %4 : vector<512x128xf32> to vector<512x128xbf16>
    %c0_4 = arith.constant 0 : index
    %c0_5 = arith.constant 0 : index
    %6 = vector.load %arg3[%c0_4, %c0_5] : memref<512x128xbf16, #tpu.memory_space<vmem>>, vector<512x128xbf16>
    tpu.vector_store %arg3[%c0_4, %c0_5], %5 {strides = array<i32>} : memref<512x128xbf16, #tpu.memory_space<vmem>>, vector<512x128xbf16>,
    %cst_6 = arith.constant dense<0.000000e+00> : vector<128xf32>
    %7 = vector.multi_reduction <add>, %4, %cst_6 [0] : vector<512x128xf32> to vector<128xf32>
    %8 = vector.shape_cast %7 : vector<128xf32> to vector<1x128xf32>
    %9 = arith.mulf %4, %4 : vector<512x128xf32>
    %cst_7 = arith.constant dense<0.000000e+00> : vector<128xf32>
    %10 = vector.multi_reduction <add>, %9, %cst_7 [0] : vector<512x128xf32> to vector<128xf32>
    %11 = vector.shape_cast %10 : vector<128xf32> to vector<1x128xf32>
    %12 = tpu.concatenate %8, %11 in 0 : vector<1x128xf32>, vector<1x128xf32> -> vector<2x128xf32>
    %13 = vector.shape_cast %12 : vector<2x128xf32> to vector<1x2x128xf32>
    %c0_8 = arith.constant 0 : index
    %c0_9 = arith.constant 0 : index
    %c0_10 = arith.constant 0 : index
    %14 = vector.load %arg4[%c0_8, %c0_9, %c0_10] : memref<1x2x128xf32, #tpu.memory_space<vmem>>, vector<1x2x128xf32>
    tpu.vector_store %arg4[%c0_8, %c0_9, %c0_10], %13 {strides = array<i32>} : memref<1x2x128xf32, #tpu.memory_space<vmem>>, vector<1x2x128xf32>,
    return
  }
  func.func @transform_0(%arg0: i32) -> (i32, i32) {
    %c0_i32 = arith.constant 0 : i32
    %c0_i32_0 = arith.constant 0 : i32
    return %arg0, %c0_i32 : i32, i32
  }
  func.func @transform_1(%arg0: i32) -> (i32, i32) {
    %c0_i32 = arith.constant 0 : i32
    %c0_i32_0 = arith.constant 0 : i32
    %c0_i32_1 = arith.constant 0 : i32
    return %c0_i32, %c0_i32_0 : i32, i32
  }
  func.func @transform_2(%arg0: i32) -> (i32, i32) {
    %c0_i32 = arith.constant 0 : i32
    %c0_i32_0 = arith.constant 0 : i32
    return %arg0, %c0_i32 : i32, i32
  }
  func.func @transform_3(%arg0: i32) -> (i32, i32, i32) {
    %c0_i32 = arith.constant 0 : i32
    %c0_i32_0 = arith.constant 0 : i32
    %c0_i32_1 = arith.constant 0 : i32
    return %arg0, %c0_i32, %c0_i32_0 : i32, i32, i32
  }
}

</mosaic_0001>

<llo_original>
// kernel: tpu_custom_call.1
$region0: #{tpu_custom_call.1}
  #allocation0 [shape = 'u32[]', space=smem, size = 0x4, offset = 0x4, fixed_abs, tag = 'smem constant byte address 0x4 - core index']
  #allocation1 [shape = 'u32[144,128]{1,0:T(1,128)}', space=vmem, size = 0x12000, scoped, tag = 'internal scratch']
  %s0 = inlined_call_operand.hbm [shape: bf16[512,128], index: 0, kind: input, shape index: {}]
  %s1 = inlined_call_operand.hbm [shape: bf16[128,128], index: 1, kind: input, shape index: {}]
  %s2 = inlined_call_operand.hbm [shape: bf16[512,128], index: 2, kind: output, shape index: {0}]
  %s3 = inlined_call_operand.hbm [shape: f32[1,2,128], index: 3, kind: output, shape index: {1}]
  %4 = xla_tuple %s2, %s3
  %s5 = sld [smem:[#allocation0]]
  $region34: #{tpu_custom_call.1} parent=0
    _
  %s7 = ssub.s32 1, %s5
  %s8 = scalar_select 0, %s7, %s5
  $region1: #{tpu_custom_call.1} parent=0
    #allocation2 [shape = 'u8[131072]{0}', space=vmem, size = 0x20000, scoped, tag = 'input window, operand 0, single buffered']
    #allocation3 [shape = 's32[1]{0}', space=sflag, size = 0x4, scoped, tag = 'scoped memory for tpu_custom_call.1']
    #allocation4 [shape = 's32[1]{0}', space=sflag, size = 0x4, scoped, tag = 'scoped memory for tpu_custom_call.1']
    #allocation5 [shape = 'u8[32768]{0}', space=vmem, size = 0x8000, scoped, tag = 'input window, operand 1, single buffered']
    #allocation6 [shape = 's32[1]{0}', space=sflag, size = 0x4, scoped, tag = 'scoped memory for tpu_custom_call.1']
    #allocation7 [shape = 'u8[131072]{0}', space=vmem, size = 0x20000, scoped, tag = 'output window, operand 0, single buffered']
    #allocation8 [shape = 'u8[1024]{0}', space=vmem, size = 0x400, scoped, tag = 'output window, operand 1, single buffered']
    #allocation9 [shape = 's32[1]{0}', space=sflag, size = 0x4, scoped, tag = 'scoped memory for tpu_custom_call.1']
    %9 = vsyncpa [#allocation3], 0
    %10 = vsyncpa [#allocation6], 0
    %11 = vsyncpa [#allocation4], 0
    %12 = vsyncpa [#allocation9], 0
    // Predicated region
    $region2: #{tpu_custom_call.1} parent=1 // pred_check
      _
    $region3: #{tpu_custom_call.1} parent=1 // pred_check_branch
      %14 = sbr.rel (0) target = $region5
    $region4: #{tpu_custom_call.1} parent=1 // pred_region
      %s16 = ssub.s32 4096, 4096
      %17 = vsyncadd [#allocation3], %s16
      %s18 = sshll.u32 [#allocation2], 4
      %s19 = int_to_ptr.vmem [resolvable:$true] %s18
      %24 = dma.hbm_to_vmem [thread:$0]  %s0, 4096, %s19, [#allocation3], 64, 64, 4
    $region5: #{tpu_custom_call.1} parent=1 // pred_fallthru
      _
    // Predicated region
    $region6: #{tpu_custom_call.1} parent=1 // pred_check
      _
    $region7: #{tpu_custom_call.1} parent=1 // pred_check_branch
      %26 = sbr.rel (0) target = $region9
    $region8: #{tpu_custom_call.1} parent=1 // pred_region
      %s28 = ssub.s32 1024, 1024
      %29 = vsyncadd [#allocation6], %s28
      %s30 = sshll.u32 [#allocation5], 4
      %s31 = int_to_ptr.vmem [resolvable:$true] %s30
      %36 = dma.hbm_to_vmem [thread:$0]  %s1, 1024, %s31, [#allocation6], 64, 64, 4
    $region9: #{tpu_custom_call.1} parent=1 // pred_fallthru
      _
    // Predicated region
    $region10: #{tpu_custom_call.1} parent=1 // pred_check
      _
    $region11: #{tpu_custom_call.1} parent=1 // pred_check_branch
      %38 = sbr.rel (0) target = $region13
    $region12: #{tpu_custom_call.1} parent=1 // pred_region
      %39 = dma.done [#allocation3], 4096
    $region13: #{tpu_custom_call.1} parent=1 // pred_fallthru
      _
    // Predicated region
    $region14: #{tpu_custom_call.1} parent=1 // pred_check
      _
    $region15: #{tpu_custom_call.1} parent=1 // pred_check_branch
      %41 = sbr.rel (0) target = $region17
    $region16: #{tpu_custom_call.1} parent=1 // pred_region
      %42 = dma.done [#allocation6], 1024
    $region17: #{tpu_custom_call.1} parent=1 // pred_fallthru
      _
    %v44 = vld [vmem:[#allocation2] sm:$0xf]
    %v45 = vld [vmem:[#allocation2 + $0x4] sm:$0xf]
    %v46 = vld [vmem:[#allocation2 + $0x8] sm:$0xf]
    %v47 = vld [vmem:[#allocation2 + $0xc] sm:$0xf]
    %v48 = vld [vmem:[#allocation2 + $0x10] sm:$0xf]
    %v49 = vld [vmem:[#allocation2 + $0x14] sm:$0xf]
    %v50 = vld [vmem:[#allocation2 + $0x18] sm:$0xf]
    %v51 = vld [vmem:[#allocation2 + $0x1c] sm:$0xf]
    %v52 = vld [vmem:[#allocation2 + $0x20] sm:$0xf]
    %v53 = vld [vmem:[#allocation2 + $0x24] sm:$0xf]
    %v54 = vld [vmem:[#allocation2 + $0x28] sm:$0xf]
    %v55 = vld [vmem:[#allocation2 + $0x2c] sm:$0xf]
    %v56 = vld [vmem:[#allocation2 + $0x30] sm:$0xf]
    %v57 = vld [vmem:[#allocation2 + $0x34] sm:$0xf]
    %v58 = vld [vmem:[#allocation2 + $0x38] sm:$0xf]
    %v59 = vld [vmem:[#allocation2 + $0x3c] sm:$0xf]
    %v60 = vld [vmem:[#allocation2 + $0x40] sm:$0xf]
    %v61 = vld [vmem:[#allocation2 + $0x44] sm:$0xf]
    %v62 = vld [vmem:[#allocation2 + $0x48] sm:$0xf]
    %v63 = vld [vmem:[#allocation2 + $0x4c] sm:$0xf]
    %v64 = vld [vmem:[#allocation2 + $0x50] sm:$0xf]
    %v65 = vld [vmem:[#allocation2 + $0x54] sm:$0xf]
    %v66 = vld [vmem:[#allocation2 + $0x58] sm:$0xf]
    %v67 = vld [vmem:[#allocation2 + $0x5c] sm:$0xf]
    %v68 = vld [vmem:[#allocation2 + $0x60] sm:$0xf]
    %v69 = vld [vmem:[#allocation2 + $0x64] sm:$0xf]
    %v70 = vld [vmem:[#allocation2 + $0x68] sm:$0xf]
    %v71 = vld [vmem:[#allocation2 + $0x6c] sm:$0xf]
    %v72 = vld [vmem:[#allocation2 + $0x70] sm:$0xf]
    %v73 = vld [vmem:[#allocation2 + $0x74] sm:$0xf]
    %v74 = vld [vmem:[#allocation2 + $0x78] sm:$0xf]
    %v75 = vld [vmem:[#allocation2 + $0x7c] sm:$0xf]
    %v76 = vld [vmem:[#allocation2 + $0x80] sm:$0xf]
    %v77 = vld [vmem:[#allocation2 + $0x84] sm:$0xf]
    %v78 = vld [vmem:[#allocation2 + $0x88] sm:$0xf]
    %v79 = vld [vmem:[#allocation2 + $0x8c] sm:$0xf]
    %v80 = vld [vmem:[#allocation2 + $0x90] sm:$0xf]
    %v81 = vld [vmem:[#allocation2 + $0x94] sm:$0xf]
    %v82 = vld [vmem:[#allocation2 + $0x98] sm:$0xf]
    %v83 = vld [vmem:[#allocation2 + $0x9c] sm:$0xf]
    %v84 = vld [vmem:[#allocation2 + $0xa0] sm:$0xf]
    %v85 = vld [vmem:[#allocation2 + $0xa4] sm:$0xf]
    %v86 = vld [vmem:[#allocation2 + $0xa8] sm:$0xf]
    %v87 = vld [vmem:[#allocation2 + $0xac] sm:$0xf]
    %v88 = vld [vmem:[#allocation2 + $0xb0] sm:$0xf]
    %v89 = vld [vmem:[#allocation2 + $0xb4] sm:$0xf]
    %v90 = vld [vmem:[#allocation2 + $0xb8] sm:$0xf]
    %v91 = vld [vmem:[#allocation2 + $0xbc] sm:$0xf]
    %v92 = vld [vmem:[#allocation2 + $0xc0] sm:$0xf]
    %v93 = vld [vmem:[#allocation2 + $0xc4] sm:$0xf]
    %v94 = vld [vmem:[#allocation2 + $0xc8] sm:$0xf]
    %v95 = vld [vmem:[#allocation2 + $0xcc] sm:$0xf]
    %v96 = vld [vmem:[#allocation2 + $0xd0] sm:$0xf]
    %v97 = vld [vmem:[#allocation2 + $0xd4] sm:$0xf]
    %v98 = vld [vmem:[#allocation2 + $0xd8] sm:$0xf]
    %v99 = vld [vmem:[#allocation2 + $0xdc] sm:$0xf]
    %v100 = vld [vmem:[#allocation2 + $0xe0] sm:$0xf]
    %v101 = vld [vmem:[#allocation2 + $0xe4] sm:$0xf]
    %v102 = vld [vmem:[#allocation2 + $0xe8] sm:$0xf]
    %v103 = vld [vmem:[#allocation2 + $0xec] sm:$0xf]
    %v104 = vld [vmem:[#allocation2 + $0xf0] sm:$0xf]
    %v105 = vld [vmem:[#allocation2 + $0xf4] sm:$0xf]
    %v106 = vld [vmem:[#allocation2 + $0xf8] sm:$0xf]
    %v107 = vld [vmem:[#allocation2 + $0xfc] sm:$0xf]
    %v108 = vld [vmem:[#allocation5] sm:$0xf]
    %v109 = vld [vmem:[#allocation5 + $0x4] sm:$0xf]
    %v110 = vld [vmem:[#allocation5 + $0x8] sm:$0xf]
    %v111 = vld [vmem:[#allocation5 + $0xc] sm:$0xf]
    %v112 = vld [vmem:[#allocation5 + $0x10] sm:$0xf]
    %v113 = vld [vmem:[#allocation5 + $0x14] sm:$0xf]
    %v114 = vld [vmem:[#allocation5 + $0x18] sm:$0xf]
    %v115 = vld [vmem:[#allocation5 + $0x1c] sm:$0xf]
    %v116 = vld [vmem:[#allocation5 + $0x20] sm:$0xf]
    %v117 = vld [vmem:[#allocation5 + $0x24] sm:$0xf]
    %v118 = vld [vmem:[#allocation5 + $0x28] sm:$0xf]
    %v119 = vld [vmem:[#allocation5 + $0x2c] sm:$0xf]
    %v120 = vld [vmem:[#allocation5 + $0x30] sm:$0xf]
    %v121 = vld [vmem:[#allocation5 + $0x34] sm:$0xf]
    %v122 = vld [vmem:[#allocation5 + $0x38] sm:$0xf]
    %v123 = vld [vmem:[#allocation5 + $0x3c] sm:$0xf]
    %v188 = vunpack.c.l.b16 %v44
    %v189 = vunpack.c.l.b16 %v45
    %v190 = vunpack.c.l.b16 %v46
    %v191 = vunpack.c.l.b16 %v47
    %v192 = vunpack.c.l.b16 %v48
    %v193 = vunpack.c.l.b16 %v49
    %v194 = vunpack.c.l.b16 %v50
    %v195 = vunpack.c.l.b16 %v51
    %v196 = vunpack.c.l.b16 %v52
    %v197 = vunpack.c.l.b16 %v53
    %v198 = vunpack.c.l.b16 %v54
    %v199 = vunpack.c.l.b16 %v55
    %v200 = vunpack.c.l.b16 %v56
    %v201 = vunpack.c.l.b16 %v57
    %v202 = vunpack.c.l.b16 %v58
    %v203 = vunpack.c.l.b16 %v59
    %v204 = vunpack.c.l.b16 %v60
    %v205 = vunpack.c.l.b16 %v61
    %v206 = vunpack.c.l.b16 %v62
    %v207 = vunpack.c.l.b16 %v63
    %v208 = vunpack.c.l.b16 %v64
    %v209 = vunpack.c.l.b16 %v65
    %v210 = vunpack.c.l.b16 %v66
    %v211 = vunpack.c.l.b16 %v67
    %v212 = vunpack.c.l.b16 %v68
    %v213 = vunpack.c.l.b16 %v69
    %v214 = vunpack.c.l.b16 %v70
    %v215 = vunpack.c.l.b16 %v71
    %v216 = vunpack.c.l.b16 %v72
    %v217 = vunpack.c.l.b16 %v73
    %v218 = vunpack.c.l.b16 %v74
    %v219 = vunpack.c.l.b16 %v75
    %v220 = vunpack.c.l.b16 %v76
    %v221 = vunpack.c.l.b16 %v77
    %v222 = vunpack.c.l.b16 %v78
    %v223 = vunpack.c.l.b16 %v79
    %v224 = vunpack.c.l.b16 %v80
    %v225 = vunpack.c.l.b16 %v81
    %v226 = vunpack.c.l.b16 %v82
    %v227 = vunpack.c.l.b16 %v83
    %v228 = vunpack.c.l.b16 %v84
    %v229 = vunpack.c.l.b16 %v85
    %v230 = vunpack.c.l.b16 %v86
    %v231 = vunpack.c.l.b16 %v87
    %v232 = vunpack.c.l.b16 %v88
    %v233 = vunpack.c.l.b16 %v89
    %v234 = vunpack.c.l.b16 %v90
    %v235 = vunpack.c.l.b16 %v91
    %v236 = vunpack.c.l.b16 %v92
    %v237 = vunpack.c.l.b16 %v93
    %v238 = vunpack.c.l.b16 %v94
    %v239 = vunpack.c.l.b16 %v95
    %v240 = vunpack.c.l.b16 %v96
    %v241 = vunpack.c.l.b16 %v97
    %v242 = vunpack.c.l.b16 %v98
    %v243 = vunpack.c.l.b16 %v99
    %v244 = vunpack.c.l.b16 %v100
    %v245 = vunpack.c.l.b16 %v101
    %v246 = vunpack.c.l.b16 %v102
    %v247 = vunpack.c.l.b16 %v103
    %v248 = vunpack.c.l.b16 %v104
    %v249 = vunpack.c.l.b16 %v105
    %v250 = vunpack.c.l.b16 %v106
    %v251 = vunpack.c.l.b16 %v107
    %v252 = vpack.c.b16 %v189, %v188
    %v253 = vpack.c.b16 %v191, %v190
    %v254 = vpack.c.b16 %v193, %v192
    %v255 = vpack.c.b16 %v195, %v194
    %v256 = vpack.c.b16 %v197, %v196
    %v257 = vpack.c.b16 %v199, %v198
    %v258 = vpack.c.b16 %v201, %v200
    %v259 = vpack.c.b16 %v203, %v202
    %v260 = vpack.c.b16 %v205, %v204
    %v261 = vpack.c.b16 %v207, %v206
    %v262 = vpack.c.b16 %v209, %v208
    %v263 = vpack.c.b16 %v211, %v210
    %v264 = vpack.c.b16 %v213, %v212
    %v265 = vpack.c.b16 %v215, %v214
    %v266 = vpack.c.b16 %v217, %v216
    %v267 = vpack.c.b16 %v219, %v218
    %v268 = vpack.c.b16 %v221, %v220
    %v269 = vpack.c.b16 %v223, %v222
    %v270 = vpack.c.b16 %v225, %v224
    %v271 = vpack.c.b16 %v227, %v226
    %v272 = vpack.c.b16 %v229, %v228
    %v273 = vpack.c.b16 %v231, %v230
    %v274 = vpack.c.b16 %v233, %v232
    %v275 = vpack.c.b16 %v235, %v234
    %v276 = vpack.c.b16 %v237, %v236
    %v277 = vpack.c.b16 %v239, %v238
    %v278 = vpack.c.b16 %v241, %v240
    %v279 = vpack.c.b16 %v243, %v242
    %v280 = vpack.c.b16 %v245, %v244
    %v281 = vpack.c.b16 %v247, %v246
    %v282 = vpack.c.b16 %v249, %v248
    %v283 = vpack.c.b16 %v251, %v250
    %v332 = vunpack.c.l.b16 %v108
    %v333 = vunpack.c.l.b16 %v109
    %v334 = vunpack.c.l.b16 %v110
    %v335 = vunpack.c.l.b16 %v111
    %v336 = vunpack.c.l.b16 %v112
    %v337 = vunpack.c.l.b16 %v113
    %v338 = vunpack.c.l.b16 %v114
    %v339 = vunpack.c.l.b16 %v115
    %v340 = vunpack.c.l.b16 %v116
    %v341 = vunpack.c.l.b16 %v117
    %v342 = vunpack.c.l.b16 %v118
    %v343 = vunpack.c.l.b16 %v119
    %v344 = vunpack.c.l.b16 %v120
    %v345 = vunpack.c.l.b16 %v121
    %v346 = vunpack.c.l.b16 %v122
    %v347 = vunpack.c.l.b16 %v123
    %v348 = vpack.c.b16 %v333, %v332
    %v349 = vpack.c.b16 %v335, %v334
    %v350 = vpack.c.b16 %v337, %v336
    %v351 = vpack.c.b16 %v339, %v338
    %v352 = vpack.c.b16 %v341, %v340
    %v353 = vpack.c.b16 %v343, %v342
    %v354 = vpack.c.b16 %v345, %v344
    %v355 = vpack.c.b16 %v347, %v346
    %364 = vmatprep.subr.bf16.mxu0 0
    %365 = vmatpush1.bf16.msra.mxu0 %v348
    %366 = vmatprep.subr.bf16.mxu0 0
    %367 = vmatpush1.bf16.msra.mxu0 %v349
    %368 = vmatprep.subr.bf16.mxu0 0
    %369 = vmatpush1.bf16.msra.mxu0 %v350
    %370 = vmatprep.subr.bf16.mxu0 0
    %371 = vmatpush1.bf16.msra.mxu0 %v351
    %372 = vmatprep.subr.bf16.mxu0 0
    %373 = vmatpush1.bf16.msra.mxu0 %v352
    %374 = vmatprep.subr.bf16.mxu0 0
    %375 = vmatpush1.bf16.msra.mxu0 %v353
    %376 = vmatprep.subr.bf16.mxu0 0
    %377 = vmatpush1.bf16.msra.mxu0 %v354
    %378 = vmatprep.subr.bf16.mxu0 0
    %379 = vmatpush1.bf16.msra.mxu0 %v355
    %380 = vmatprep.subr.bf16.mxu0 0
    %381 = vmatpush1.bf16.msra.mxu0 0
    %382 = vmatprep.subr.bf16.mxu0 0
    %383 = vmatpush1.bf16.msra.mxu0 0
    %384 = vmatprep.subr.bf16.mxu0 0
    %385 = vmatpush1.bf16.msra.mxu0 0
    %386 = vmatprep.subr.bf16.mxu0 0
    %387 = vmatpush1.bf16.msra.mxu0 0
    %388 = vmatprep.subr.bf16.mxu0 0
    %389 = vmatpush1.bf16.msra.mxu0 0
    %390 = vmatprep.subr.bf16.mxu0 0
    %391 = vmatpush1.bf16.msra.mxu0 0
    %392 = vmatprep.subr.bf16.mxu0 0
    %393 = vmatpush1.bf16.msra.mxu0 0
    %394 = vmatprep.subr.bf16.mxu0 0
    %395 = vmatpush1.bf16.msra.mxu0 0
    %396 = vmatprep.mubr.bf16.mxu0 0
    %397 = vmatmul.mubr.bf16.gmra.mrb[0].mxu0 %v252
    %v398 = vpop.f32.mrb[0].mxu0
    %v399 = vadd.f32 0.0, %v398
    %v400 = vpop.f32.mrb[0].mxu0
    %v401 = vpop.f32.mrb[0].mxu0
    %v402 = vadd.f32 0.0, %v401
    %v403 = vpop.f32.mrb[0].mxu0
    %404 = vmatprep.mubr.bf16.mxu0 0
    %405 = vmatmul.mubr.bf16.gmra.mrb[0].mxu0 %v253
    %v406 = vpop.f32.mrb[0].mxu0
    %v407 = vadd.f32 0.0, %v406
    %v408 = vpop.f32.mrb[0].mxu0
    %v409 = vpop.f32.mrb[0].mxu0
    %v410 = vadd.f32 0.0, %v409
    %v411 = vpop.f32.mrb[0].mxu0
    %412 = vmatprep.mubr.bf16.mxu0 0
    %413 = vmatmul.mubr.bf16.gmra.mrb[0].mxu0 %v254
    %v414 = vpop.f32.mrb[0].mxu0
    %v415 = vadd.f32 0.0, %v414
    %v416 = vpop.f32.mrb[0].mxu0
    %v417 = vpop.f32.mrb[0].mxu0
    %v418 = vadd.f32 0.0, %v417
    %v419 = vpop.f32.mrb[0].mxu0
    %420 = vmatprep.mubr.bf16.mxu0 0
    %421 = vmatmul.mubr.bf16.gmra.mrb[0].mxu0 %v255
    %v422 = vpop.f32.mrb[0].mxu0
    %v423 = vadd.f32 0.0, %v422
    %v424 = vpop.f32.mrb[0].mxu0
    %v425 = vpop.f32.mrb[0].mxu0
    %v426 = vadd.f32 0.0, %v425
    %v427 = vpop.f32.mrb[0].mxu0
    %428 = vmatprep.mubr.bf16.mxu0 0
    %429 = vmatmul.mubr.bf16.gmra.mrb[0].mxu0 %v256
    %v430 = vpop.f32.mrb[0].mxu0
    %v431 = vadd.f32 0.0, %v430
    %v432 = vpop.f32.mrb[0].mxu0
    %v433 = vpop.f32.mrb[0].mxu0
    %v434 = vadd.f32 0.0, %v433
    %v435 = vpop.f32.mrb[0].mxu0
    %436 = vmatprep.mubr.bf16.mxu0 0
    %437 = vmatmul.mubr.bf16.gmra.mrb[0].mxu0 %v257
    %v438 = vpop.f32.mrb[0].mxu0
    %v439 = vadd.f32 0.0, %v438
    %v440 = vpop.f32.mrb[0].mxu0
    %v441 = vpop.f32.mrb[0].mxu0
    %v442 = vadd.f32 0.0, %v441
    %v443 = vpop.f32.mrb[0].mxu0
    %444 = vmatprep.mubr.bf16.mxu0 0
    %445 = vmatmul.mubr.bf16.gmra.mrb[0].mxu0 %v258
    %v446 = vpop.f32.mrb[0].mxu0
    %v447 = vadd.f32 0.0, %v446
    %v448 = vpop.f32.mrb[0].mxu0
    %v449 = vpop.f32.mrb[0].mxu0
    %v450 = vadd.f32 0.0, %v449
    %v451 = vpop.f32.mrb[0].mxu0
    %452 = vmatprep.mubr.bf16.mxu0 0
    %453 = vmatmul.mubr.bf16.gmra.mrb[0].mxu0 %v259
    %v454 = vpop.f32.mrb[0].mxu0
    %v455 = vadd.f32 0.0, %v454
    %v456 = vpop.f32.mrb[0].mxu0
    %v457 = vpop.f32.mrb[0].mxu0
    %v458 = vadd.f32 0.0, %v457
    %v459 = vpop.f32.mrb[0].mxu0
    %460 = vmatprep.mubr.bf16.mxu0 0
    %461 = vmatmul.mubr.bf16.gmra.mrb[0].mxu0 %v260
    %v462 = vpop.f32.mrb[0].mxu0
    %v463 = vadd.f32 0.0, %v462
    %v464 = vpop.f32.mrb[0].mxu0
    %v465 = vpop.f32.mrb[0].mxu0
    %v466 = vadd.f32 0.0, %v465
    %v467 = vpop.f32.mrb[0].mxu0
    %468 = vmatprep.mubr.bf16.mxu0 0
    %469 = vmatmul.mubr.bf16.gmra.mrb[0].mxu0 %v261
    %v470 = vpop.f32.mrb[0].mxu0
    %v471 = vadd.f32 0.0, %v470
    %v472 = vpop.f32.mrb[0].mxu0
    %v473 = vpop.f32.mrb[0].mxu0
    %v474 = vadd.f32 0.0, %v473
    %v475 = vpop.f32.mrb[0].mxu0
    %476 = vmatprep.mubr.bf16.mxu0 0
    %477 = vmatmul.mubr.bf16.gmra.mrb[0].mxu0 %v262
    %v478 = vpop.f32.mrb[0].mxu0
    %v479 = vadd.f32 0.0, %v478
    %v480 = vpop.f32.mrb[0].mxu0
    %v481 = vpop.f32.mrb[0].mxu0
    %v482 = vadd.f32 0.0, %v481
    %v483 = vpop.f32.mrb[0].mxu0
    %484 = vmatprep.mubr.bf16.mxu0 0
    %485 = vmatmul.mubr.bf16.gmra.mrb[0].mxu0 %v263
    %v486 = vpop.f32.mrb[0].mxu0
    %v487 = vadd.f32 0.0, %v486
    %v488 = vpop.f32.mrb[0].mxu0
    %v489 = vpop.f32.mrb[0].mxu0
    %v490 = vadd.f32 0.0, %v489
    %v491 = vpop.f32.mrb[0].mxu0
    %492 = vmatprep.mubr.bf16.mxu0 0
    %493 = vmatmul.mubr.bf16.gmra.mrb[0].mxu0 %v264
    %v494 = vpop.f32.mrb[0].mxu0
    %v495 = vadd.f32 0.0, %v494
    %v496 = vpop.f32.mrb[0].mxu0
    %v497 = vpop.f32.mrb[0].mxu0
    %v498 = vadd.f32 0.0, %v497
    %v499 = vpop.f32.mrb[0].mxu0
    %500 = vmatprep.mubr.bf16.mxu0 0
    %501 = vmatmul.mubr.bf16.gmra.mrb[0].mxu0 %v265
    %v502 = vpop.f32.mrb[0].mxu0
    %v503 = vadd.f32 0.0, %v502
    %v504 = vpop.f32.mrb[0].mxu0
    %v505 = vpop.f32.mrb[0].mxu0
    %v506 = vadd.f32 0.0, %v505
    %v507 = vpop.f32.mrb[0].mxu0
    %508 = vmatprep.mubr.bf16.mxu0 0
    %509 = vmatmul.mubr.bf16.gmra.mrb[0].mxu0 %v266
    %v510 = vpop.f32.mrb[0].mxu0
    %v511 = vadd.f32 0.0, %v510
    %v512 = vpop.f32.mrb[0].mxu0
    %v513 = vpop.f32.mrb[0].mxu0
    %v514 = vadd.f32 0.0, %v513
    %v515 = vpop.f32.mrb[0].mxu0
    %516 = vmatprep.mubr.bf16.mxu0 0
    %517 = vmatmul.mubr.bf16.gmra.mrb[0].mxu0 %v267
    %v518 = vpop.f32.mrb[0].mxu0
    %v519 = vadd.f32 0.0, %v518
    %v520 = vpop.f32.mrb[0].mxu0
    %v521 = vpop.f32.mrb[0].mxu0
    %v522 = vadd.f32 0.0, %v521
    %v523 = vpop.f32.mrb[0].mxu0
    %524 = vmatprep.mubr.bf16.mxu0 0
    %525 = vmatmul.mubr.bf16.gmra.mrb[0].mxu0 %v268
    %v526 = vpop.f32.mrb[0].mxu0
    %v527 = vadd.f32 0.0, %v526
    %v528 = vpop.f32.mrb[0].mxu0
    %v529 = vpop.f32.mrb[0].mxu0
    %v530 = vadd.f32 0.0, %v529
    %v531 = vpop.f32.mrb[0].mxu0
    %532 = vmatprep.mubr.bf16.mxu0 0
    %533 = vmatmul.mubr.bf16.gmra.mrb[0].mxu0 %v269
    %v534 = vpop.f32.mrb[0].mxu0
    %v535 = vadd.f32 0.0, %v534
    %v536 = vpop.f32.mrb[0].mxu0
    %v537 = vpop.f32.mrb[0].mxu0
    %v538 = vadd.f32 0.0, %v537
    %v539 = vpop.f32.mrb[0].mxu0
    %540 = vmatprep.mubr.bf16.mxu0 0
    %541 = vmatmul.mubr.bf16.gmra.mrb[0].mxu0 %v270
    %v542 = vpop.f32.mrb[0].mxu0
    %v543 = vadd.f32 0.0, %v542
    %v544 = vpop.f32.mrb[0].mxu0
    %v545 = vpop.f32.mrb[0].mxu0
    %v546 = vadd.f32 0.0, %v545
    %v547 = vpop.f32.mrb[0].mxu0
    %548 = vmatprep.mubr.bf16.mxu0 0
    %549 = vmatmul.mubr.bf16.gmra.mrb[0].mxu0 %v271
    %v550 = vpop.f32.mrb[0].mxu0
    %v551 = vadd.f32 0.0, %v550
    %v552 = vpop.f32.mrb[0].mxu0
    %v553 = vpop.f32.mrb[0].mxu0
    %v554 = vadd.f32 0.0, %v553
    %v555 = vpop.f32.mrb[0].mxu0
    %556 = vmatprep.mubr.bf16.mxu0 0
    %557 = vmatmul.mubr.bf16.gmra.mrb[0].mxu0 %v272
    %v558 = vpop.f32.mrb[0].mxu0
    %v559 = vadd.f32 0.0, %v558
    %v560 = vpop.f32.mrb[0].mxu0
    %v561 = vpop.f32.mrb[0].mxu0
    %v562 = vadd.f32 0.0, %v561
    %v563 = vpop.f32.mrb[0].mxu0
    %564 = vmatprep.mubr.bf16.mxu0 0
    %565 = vmatmul.mubr.bf16.gmra.mrb[0].mxu0 %v273
    %v566 = vpop.f32.mrb[0].mxu0
    %v567 = vadd.f32 0.0, %v566
    %v568 = vpop.f32.mrb[0].mxu0
    %v569 = vpop.f32.mrb[0].mxu0
    %v570 = vadd.f32 0.0, %v569
    %v571 = vpop.f32.mrb[0].mxu0
    %572 = vmatprep.mubr.bf16.mxu0 0
    %573 = vmatmul.mubr.bf16.gmra.mrb[0].mxu0 %v274
    %v574 = vpop.f32.mrb[0].mxu0
    %v575 = vadd.f32 0.0, %v574
    %v576 = vpop.f32.mrb[0].mxu0
    %v577 = vpop.f32.mrb[0].mxu0
    %v578 = vadd.f32 0.0, %v577
    %v579 = vpop.f32.mrb[0].mxu0
    %580 = vmatprep.mubr.bf16.mxu0 0
    %581 = vmatmul.mubr.bf16.gmra.mrb[0].mxu0 %v275
    %v582 = vpop.f32.mrb[0].mxu0
    %v583 = vadd.f32 0.0, %v582
    %v584 = vpop.f32.mrb[0].mxu0
    %v585 = vpop.f32.mrb[0].mxu0
    %v586 = vadd.f32 0.0, %v585
    %v587 = vpop.f32.mrb[0].mxu0
    %588 = vmatprep.mubr.bf16.mxu0 0
    %589 = vmatmul.mubr.bf16.gmra.mrb[0].mxu0 %v276
    %v590 = vpop.f32.mrb[0].mxu0
    %v591 = vadd.f32 0.0, %v590
    %v592 = vpop.f32.mrb[0].mxu0
    %v593 = vpop.f32.mrb[0].mxu0
    %v594 = vadd.f32 0.0, %v593
    %v595 = vpop.f32.mrb[0].mxu0
    %596 = vmatprep.mubr.bf16.mxu0 0
    %597 = vmatmul.mubr.bf16.gmra.mrb[0].mxu0 %v277
    %v598 = vpop.f32.mrb[0].mxu0
    %v599 = vadd.f32 0.0, %v598
    %v600 = vpop.f32.mrb[0].mxu0
    %v601 = vpop.f32.mrb[0].mxu0
    %v602 = vadd.f32 0.0, %v601
    %v603 = vpop.f32.mrb[0].mxu0
    %604 = vmatprep.mubr.bf16.mxu0 0
    %605 = vmatmul.mubr.bf16.gmra.mrb[0].mxu0 %v278
    %v606 = vpop.f32.mrb[0].mxu0
    %v607 = vadd.f32 0.0, %v606
    %v608 = vpop.f32.mrb[0].mxu0
    %v609 = vpop.f32.mrb[0].mxu0
    %v610 = vadd.f32 0.0, %v609
    %v611 = vpop.f32.mrb[0].mxu0
    %612 = vmatprep.mubr.bf16.mxu0 0
    %613 = vmatmul.mubr.bf16.gmra.mrb[0].mxu0 %v279
    %v614 = vpop.f32.mrb[0].mxu0
    %v615 = vadd.f32 0.0, %v614
    %v616 = vpop.f32.mrb[0].mxu0
    %v617 = vpop.f32.mrb[0].mxu0
    %v618 = vadd.f32 0.0, %v617
    %v619 = vpop.f32.mrb[0].mxu0
    %620 = vmatprep.mubr.bf16.mxu0 0
    %621 = vmatmul.mubr.bf16.gmra.mrb[0].mxu0 %v280
    %v622 = vpop.f32.mrb[0].mxu0
    %v623 = vadd.f32 0.0, %v622
    %v624 = vpop.f32.mrb[0].mxu0
    %v625 = vpop.f32.mrb[0].mxu0
    %v626 = vadd.f32 0.0, %v625
    %v627 = vpop.f32.mrb[0].mxu0
    %628 = vmatprep.mubr.bf16.mxu0 0
    %629 = vmatmul.mubr.bf16.gmra.mrb[0].mxu0 %v281
    %v630 = vpop.f32.mrb[0].mxu0
    %v631 = vadd.f32 0.0, %v630
    %v632 = vpop.f32.mrb[0].mxu0
    %v633 = vpop.f32.mrb[0].mxu0
    %v634 = vadd.f32 0.0, %v633
    %v635 = vpop.f32.mrb[0].mxu0
    %636 = vmatprep.mubr.bf16.mxu0 0
    %637 = vmatmul.mubr.bf16.gmra.mrb[0].mxu0 %v282
    %v638 = vpop.f32.mrb[0].mxu0
    %v639 = vadd.f32 0.0, %v638
    %v640 = vpop.f32.mrb[0].mxu0
    %v641 = vpop.f32.mrb[0].mxu0
    %v642 = vadd.f32 0.0, %v641
    %v643 = vpop.f32.mrb[0].mxu0
    %644 = vmatprep.mubr.bf16.mxu0 0
    %645 = vmatmul.mubr.bf16.gmra.mrb[0].mxu0 %v283
    %v646 = vpop.f32.mrb[0].mxu0
    %v647 = vadd.f32 0.0, %v646
    %v648 = vpop.f32.mrb[0].mxu0
    %v649 = vpop.f32.mrb[0].mxu0
    %v650 = vadd.f32 0.0, %v649
    %v651 = vpop.f32.mrb[0].mxu0
    %652 = vdwg.mxu0
    %v653 = vmax.f32 %v399, 0.0
    %v654 = vmax.f32 %v402, 0.0
    %v655 = vmax.f32 %v407, 0.0
    %v656 = vmax.f32 %v410, 0.0
    %v657 = vmax.f32 %v415, 0.0
    %v658 = vmax.f32 %v418, 0.0
    %v659 = vmax.f32 %v423, 0.0
    %v660 = vmax.f32 %v426, 0.0
    %v661 = vmax.f32 %v431, 0.0
    %v662 = vmax.f32 %v434, 0.0
    %v663 = vmax.f32 %v439, 0.0
    %v664 = vmax.f32 %v442, 0.0
    %v665 = vmax.f32 %v447, 0.0
    %v666 = vmax.f32 %v450, 0.0
    %v667 = vmax.f32 %v455, 0.0
    %v668 = vmax.f32 %v458, 0.0
    %v669 = vmax.f32 %v463, 0.0
    %v670 = vmax.f32 %v466, 0.0
    %v671 = vmax.f32 %v471, 0.0
    %v672 = vmax.f32 %v474, 0.0
    %v673 = vmax.f32 %v479, 0.0
    %v674 = vmax.f32 %v482, 0.0
    %v675 = vmax.f32 %v487, 0.0
    %v676 = vmax.f32 %v490, 0.0
    %v677 = vmax.f32 %v495, 0.0
    %v678 = vmax.f32 %v498, 0.0
    %v679 = vmax.f32 %v503, 0.0
    %v680 = vmax.f32 %v506, 0.0
    %v681 = vmax.f32 %v511, 0.0
    %v682 = vmax.f32 %v514, 0.0
    %v683 = vmax.f32 %v519, 0.0
    %v684 = vmax.f32 %v522, 0.0
    %v685 = vmax.f32 %v527, 0.0
    %v686 = vmax.f32 %v530, 0.0
    %v687 = vmax.f32 %v535, 0.0
    %v688 = vmax.f32 %v538, 0.0
    %v689 = vmax.f32 %v543, 0.0
    %v690 = vmax.f32 %v546, 0.0
    %v691 = vmax.f32 %v551, 0.0
    %v692 = vmax.f32 %v554, 0.0
    %v693 = vmax.f32 %v559, 0.0
    %v694 = vmax.f32 %v562, 0.0
    %v695 = vmax.f32 %v567, 0.0
    %v696 = vmax.f32 %v570, 0.0
    %v697 = vmax.f32 %v575, 0.0
    %v698 = vmax.f32 %v578, 0.0
    %v699 = vmax.f32 %v583, 0.0
    %v700 = vmax.f32 %v586, 0.0
    %v701 = vmax.f32 %v591, 0.0
    %v702 = vmax.f32 %v594, 0.0
    %v703 = vmax.f32 %v599, 0.0
    %v704 = vmax.f32 %v602, 0.0
    %v705 = vmax.f32 %v607, 0.0
    %v706 = vmax.f32 %v610, 0.0
    %v707 = vmax.f32 %v615, 0.0
    %v708 = vmax.f32 %v618, 0.0
    %v709 = vmax.f32 %v623, 0.0
    %v710 = vmax.f32 %v626, 0.0
    %v711 = vmax.f32 %v631, 0.0
    %v712 = vmax.f32 %v634, 0.0
    %v713 = vmax.f32 %v639, 0.0
    %v714 = vmax.f32 %v642, 0.0
    %v715 = vmax.f32 %v647, 0.0
    %v716 = vmax.f32 %v650, 0.0
    %v717 = vpack.c.bf16 %v654, %v653
    %v718 = vpack.c.bf16 %v656, %v655
    %v719 = vpack.c.bf16 %v658, %v657
    %v720 = vpack.c.bf16 %v660, %v659
    %v721 = vpack.c.bf16 %v662, %v661
    %v722 = vpack.c.bf16 %v664, %v663
    %v723 = vpack.c.bf16 %v666, %v665
    %v724 = vpack.c.bf16 %v668, %v667
    %v725 = vpack.c.bf16 %v670, %v669
    %v726 = vpack.c.bf16 %v672, %v671
    %v727 = vpack.c.bf16 %v674, %v673
    %v728 = vpack.c.bf16 %v676, %v675
    %v729 = vpack.c.bf16 %v678, %v677
    %v730 = vpack.c.bf16 %v680, %v679
    %v731 = vpack.c.bf16 %v682, %v681
    %v732 = vpack.c.bf16 %v684, %v683
    %v733 = vpack.c.bf16 %v686, %v685
    %v734 = vpack.c.bf16 %v688, %v687
    %v735 = vpack.c.bf16 %v690, %v689
    %v736 = vpack.c.bf16 %v692, %v691
    %v737 = vpack.c.bf16 %v694, %v693
    %v738 = vpack.c.bf16 %v696, %v695
    %v739 = vpack.c.bf16 %v698, %v697
    %v740 = vpack.c.bf16 %v700, %v699
    %v741 = vpack.c.bf16 %v702, %v701
    %v742 = vpack.c.bf16 %v704, %v703
    %v743 = vpack.c.bf16 %v706, %v705
    %v744 = vpack.c.bf16 %v708, %v707
    %v745 = vpack.c.bf16 %v710, %v709
    %v746 = vpack.c.bf16 %v712, %v711
    %v747 = vpack.c.bf16 %v714, %v713
    %v748 = vpack.c.bf16 %v716, %v715
    %v781 = vunpack.c.l.b16 %v717
    %v782 = vunpack.c.h.b16 %v717
    %v783 = vunpack.c.l.b16 %v718
    %v784 = vunpack.c.h.b16 %v718
    %v785 = vunpack.c.l.b16 %v719
    %v786 = vunpack.c.h.b16 %v719
    %v787 = vunpack.c.l.b16 %v720
    %v788 = vunpack.c.h.b16 %v720
    %v789 = vunpack.c.l.b16 %v721
    %v790 = vunpack.c.h.b16 %v721
    %v791 = vunpack.c.l.b16 %v722
    %v792 = vunpack.c.h.b16 %v722
    %v793 = vunpack.c.l.b16 %v723
    %v794 = vunpack.c.h.b16 %v723
    %v795 = vunpack.c.l.b16 %v724
    %v796 = vunpack.c.h.b16 %v724
    %v797 = vunpack.c.l.b16 %v725
    %v798 = vunpack.c.h.b16 %v725
    %v799 = vunpack.c.l.b16 %v726
    %v800 = vunpack.c.h.b16 %v726
    %v801 = vunpack.c.l.b16 %v727
    %v802 = vunpack.c.h.b16 %v727
    %v803 = vunpack.c.l.b16 %v728
    %v804 = vunpack.c.h.b16 %v728
    %v805 = vunpack.c.l.b16 %v729
    %v806 = vunpack.c.h.b16 %v729
    %v807 = vunpack.c.l.b16 %v730
    %v808 = vunpack.c.h.b16 %v730
    %v809 = vunpack.c.l.b16 %v731
    %v810 = vunpack.c.h.b16 %v731
    %v811 = vunpack.c.l.b16 %v732
    %v812 = vunpack.c.h.b16 %v732
    %v813 = vunpack.c.l.b16 %v733
    %v814 = vunpack.c.h.b16 %v733
    %v815 = vunpack.c.l.b16 %v734
    %v816 = vunpack.c.h.b16 %v734
    %v817 = vunpack.c.l.b16 %v735
    %v818 = vunpack.c.h.b16 %v735
    %v819 = vunpack.c.l.b16 %v736
    %v820 = vunpack.c.h.b16 %v736
    %v821 = vunpack.c.l.b16 %v737
    %v822 = vunpack.c.h.b16 %v737
    %v823 = vunpack.c.l.b16 %v738
    %v824 = vunpack.c.h.b16 %v738
    %v825 = vunpack.c.l.b16 %v739
    %v826 = vunpack.c.h.b16 %v739
    %v827 = vunpack.c.l.b16 %v740
    %v828 = vunpack.c.h.b16 %v740
    %v829 = vunpack.c.l.b16 %v741
    %v830 = vunpack.c.h.b16 %v741
    %v831 = vunpack.c.l.b16 %v742
    %v832 = vunpack.c.h.b16 %v742
    %v833 = vunpack.c.l.b16 %v743
    %v834 = vunpack.c.h.b16 %v743
    %v835 = vunpack.c.l.b16 %v744
    %v836 = vunpack.c.h.b16 %v744
    %v837 = vunpack.c.l.b16 %v745
    %v838 = vunpack.c.h.b16 %v745
    %v839 = vunpack.c.l.b16 %v746
    %v840 = vunpack.c.h.b16 %v746
    %v841 = vunpack.c.l.b16 %v747
    %v842 = vunpack.c.h.b16 %v747
    %v843 = vunpack.c.l.b16 %v748
    %v844 = vunpack.c.h.b16 %v748
    %v845 = vpack.c.b16 %v781, %v781
    %v846 = vpack.c.b16 %v782, %v782
    %v847 = vpack.c.b16 %v783, %v783
    %v848 = vpack.c.b16 %v784, %v784
    %v849 = vpack.c.b16 %v785, %v785
    %v850 = vpack.c.b16 %v786, %v786
    %v851 = vpack.c.b16 %v787, %v787
    %v852 = vpack.c.b16 %v788, %v788
    %v853 = vpack.c.b16 %v789, %v789
    %v854 = vpack.c.b16 %v790, %v790
    %v855 = vpack.c.b16 %v791, %v791
    %v856 = vpack.c.b16 %v792, %v792
    %v857 = vpack.c.b16 %v793, %v793
    %v858 = vpack.c.b16 %v794, %v794
    %v859 = vpack.c.b16 %v795, %v795
    %v860 = vpack.c.b16 %v796, %v796
    %v861 = vpack.c.b16 %v797, %v797
    %v862 = vpack.c.b16 %v798, %v798
    %v863 = vpack.c.b16 %v799, %v799
    %v864 = vpack.c.b16 %v800, %v800
    %v865 = vpack.c.b16 %v801, %v801
    %v866 = vpack.c.b16 %v802, %v802
    %v867 = vpack.c.b16 %v803, %v803
    %v868 = vpack.c.b16 %v804, %v804
    %v869 = vpack.c.b16 %v805, %v805
    %v870 = vpack.c.b16 %v806, %v806
    %v871 = vpack.c.b16 %v807, %v807
    %v872 = vpack.c.b16 %v808, %v808
    %v873 = vpack.c.b16 %v809, %v809
    %v874 = vpack.c.b16 %v810, %v810
    %v875 = vpack.c.b16 %v811, %v811
    %v876 = vpack.c.b16 %v812, %v812
    %v877 = vpack.c.b16 %v813, %v813
    %v878 = vpack.c.b16 %v814, %v814
    %v879 = vpack.c.b16 %v815, %v815
    %v880 = vpack.c.b16 %v816, %v816
    %v881 = vpack.c.b16 %v817, %v817
    %v882 = vpack.c.b16 %v818, %v818
    %v883 = vpack.c.b16 %v819, %v819
    %v884 = vpack.c.b16 %v820, %v820
    %v885 = vpack.c.b16 %v821, %v821
    %v886 = vpack.c.b16 %v822, %v822
    %v887 = vpack.c.b16 %v823, %v823
    %v888 = vpack.c.b16 %v824, %v824
    %v889 = vpack.c.b16 %v825, %v825
    %v890 = vpack.c.b16 %v826, %v826
    %v891 = vpack.c.b16 %v827, %v827
    %v892 = vpack.c.b16 %v828, %v828
    %v893 = vpack.c.b16 %v829, %v829
    %v894 = vpack.c.b16 %v830, %v830
    %v895 = vpack.c.b16 %v831, %v831
    %v896 = vpack.c.b16 %v832, %v832
    %v897 = vpack.c.b16 %v833, %v833
    %v898 = vpack.c.b16 %v834, %v834
    %v899 = vpack.c.b16 %v835, %v835
    %v900 = vpack.c.b16 %v836, %v836
    %v901 = vpack.c.b16 %v837, %v837
    %v902 = vpack.c.b16 %v838, %v838
    %v903 = vpack.c.b16 %v839, %v839
    %v904 = vpack.c.b16 %v840, %v840
    %v905 = vpack.c.b16 %v841, %v841
    %v906 = vpack.c.b16 %v842, %v842
    %v907 = vpack.c.b16 %v843, %v843
    %v908 = vpack.c.b16 %v844, %v844
    %973 = vst [vmem:[#allocation7] sm:$0xf] %v845
    %974 = vst [vmem:[#allocation7 + $0x4] sm:$0xf] %v846
    %975 = vst [vmem:[#allocation7 + $0x8] sm:$0xf] %v847
    %976 = vst [vmem:[#allocation7 + $0xc] sm:$0xf] %v848
    %977 = vst [vmem:[#allocation7 + $0x10] sm:$0xf] %v849
    %978 = vst [vmem:[#allocation7 + $0x14] sm:$0xf] %v850
    %979 = vst [vmem:[#allocation7 + $0x18] sm:$0xf] %v851
    %980 = vst [vmem:[#allocation7 + $0x1c] sm:$0xf] %v852
    %981 = vst [vmem:[#allocation7 + $0x20] sm:$0xf] %v853
    %982 = vst [vmem:[#allocation7 + $0x24] sm:$0xf] %v854
    %983 = vst [vmem:[#allocation7 + $0x28] sm:$0xf] %v855
    %984 = vst [vmem:[#allocation7 + $0x2c] sm:$0xf] %v856
    %985 = vst [vmem:[#allocation7 + $0x30] sm:$0xf] %v857
    %986 = vst [vmem:[#allocation7 + $0x34] sm:$0xf] %v858
    %987 = vst [vmem:[#allocation7 + $0x38] sm:$0xf] %v859
    %988 = vst [vmem:[#allocation7 + $0x3c] sm:$0xf] %v860
    %989 = vst [vmem:[#allocation7 + $0x40] sm:$0xf] %v861
    %990 = vst [vmem:[#allocation7 + $0x44] sm:$0xf] %v862
    %991 = vst [vmem:[#allocation7 + $0x48] sm:$0xf] %v863
    %992 = vst [vmem:[#allocation7 + $0x4c] sm:$0xf] %v864
    %993 = vst [vmem:[#allocation7 + $0x50] sm:$0xf] %v865
    %994 = vst [vmem:[#allocation7 + $0x54] sm:$0xf] %v866
    %995 = vst [vmem:[#allocation7 + $0x58] sm:$0xf] %v867
    %996 = vst [vmem:[#allocation7 + $0x5c] sm:$0xf] %v868
    %997 = vst [vmem:[#allocation7 + $0x60] sm:$0xf] %v869
    %998 = vst [vmem:[#allocation7 + $0x64] sm:$0xf] %v870
    %999 = vst [vmem:[#allocation7 + $0x68] sm:$0xf] %v871
    %1000 = vst [vmem:[#allocation7 + $0x6c] sm:$0xf] %v872
    %1001 = vst [vmem:[#allocation7 + $0x70] sm:$0xf] %v873
    %1002 = vst [vmem:[#allocation7 + $0x74] sm:$0xf] %v874
    %1003 = vst [vmem:[#allocation7 + $0x78] sm:$0xf] %v875
    %1004 = vst [vmem:[#allocation7 + $0x7c] sm:$0xf] %v876
    %1005 = vst [vmem:[#allocation7 + $0x80] sm:$0xf] %v877
    %1006 = vst [vmem:[#allocation7 + $0x84] sm:$0xf] %v878
    %1007 = vst [vmem:[#allocation7 + $0x88] sm:$0xf] %v879
    %1008 = vst [vmem:[#allocation7 + $0x8c] sm:$0xf] %v880
    %1009 = vst [vmem:[#allocation7 + $0x90] sm:$0xf] %v881
    %1010 = vst [vmem:[#allocation7 + $0x94] sm:$0xf] %v882
    %1011 = vst [vmem:[#allocation7 + $0x98] sm:$0xf] %v883
    %1012 = vst [vmem:[#allocation7 + $0x9c] sm:$0xf] %v884
    %1013 = vst [vmem:[#allocation7 + $0xa0] sm:$0xf] %v885
    %1014 = vst [vmem:[#allocation7 + $0xa4] sm:$0xf] %v886
    %1015 = vst [vmem:[#allocation7 + $0xa8] sm:$0xf] %v887
    %1016 = vst [vmem:[#allocation7 + $0xac] sm:$0xf] %v888
    %1017 = vst [vmem:[#allocation7 + $0xb0] sm:$0xf] %v889
    %1018 = vst [vmem:[#allocation7 + $0xb4] sm:$0xf] %v890
    %1019 = vst [vmem:[#allocation7 + $0xb8] sm:$0xf] %v891
    %1020 = vst [vmem:[#allocation7 + $0xbc] sm:$0xf] %v892
    %1021 = vst [vmem:[#allocation7 + $0xc0] sm:$0xf] %v893
    %1022 = vst [vmem:[#allocation7 + $0xc4] sm:$0xf] %v894
    %1023 = vst [vmem:[#allocation7 + $0xc8] sm:$0xf] %v895
    %1024 = vst [vmem:[#allocation7 + $0xcc] sm:$0xf] %v896
    %1025 = vst [vmem:[#allocation7 + $0xd0] sm:$0xf] %v897
    %1026 = vst [vmem:[#allocation7 + $0xd4] sm:$0xf] %v898
    %1027 = vst [vmem:[#allocation7 + $0xd8] sm:$0xf] %v899
    %1028 = vst [vmem:[#allocation7 + $0xdc] sm:$0xf] %v900
    %1029 = vst [vmem:[#allocation7 + $0xe0] sm:$0xf] %v901
    %1030 = vst [vmem:[#allocation7 + $0xe4] sm:$0xf] %v902
    %1031 = vst [vmem:[#allocation7 + $0xe8] sm:$0xf] %v903
    %1032 = vst [vmem:[#allocation7 + $0xec] sm:$0xf] %v904
    %1033 = vst [vmem:[#allocation7 + $0xf0] sm:$0xf] %v905
    %1034 = vst [vmem:[#allocation7 + $0xf4] sm:$0xf] %v906
    %1035 = vst [vmem:[#allocation7 + $0xf8] sm:$0xf] %v907
    %1036 = vst [vmem:[#allocation7 + $0xfc] sm:$0xf] %v908
    %v1037 = vadd.f32 %v653, %v654
    %v1038 = vadd.f32 %v1037, %v655
    %v1039 = vadd.f32 %v1038, %v656
    %v1040 = vadd.f32 %v1039, %v657
    %v1041 = vadd.f32 %v1040, %v658
    %v1042 = vadd.f32 %v1041, %v659
    %v1043 = vadd.f32 %v1042, %v660
    %v1044 = vadd.f32 %v1043, %v661
    %v1045 = vadd.f32 %v1044, %v662
    %v1046 = vadd.f32 %v1045, %v663
    %v1047 = vadd.f32 %v1046, %v664
    %v1048 = vadd.f32 %v1047, %v665
    %v1049 = vadd.f32 %v1048, %v666
    %v1050 = vadd.f32 %v1049, %v667
    %v1051 = vadd.f32 %v1050, %v668
    %v1052 = vadd.f32 %v1051, %v669
    %v1053 = vadd.f32 %v1052, %v670
    %v1054 = vadd.f32 %v1053, %v671
    %v1055 = vadd.f32 %v1054, %v672
    %v1056 = vadd.f32 %v1055, %v673
    %v1057 = vadd.f32 %v1056, %v674
    %v1058 = vadd.f32 %v1057, %v675
    %v1059 = vadd.f32 %v1058, %v676
    %v1060 = vadd.f32 %v1059, %v677
    %v1061 = vadd.f32 %v1060, %v678
    %v1062 = vadd.f32 %v1061, %v679
    %v1063 = vadd.f32 %v1062, %v680
    %v1064 = vadd.f32 %v1063, %v681
    %v1065 = vadd.f32 %v1064, %v682
    %v1066 = vadd.f32 %v1065, %v683
    %v1067 = vadd.f32 %v1066, %v684
    %v1068 = vadd.f32 %v1067, %v685
    %v1069 = vadd.f32 %v1068, %v686
    %v1070 = vadd.f32 %v1069, %v687
    %v1071 = vadd.f32 %v1070, %v688
    %v1072 = vadd.f32 %v1071, %v689
    %v1073 = vadd.f32 %v1072, %v690
    %v1074 = vadd.f32 %v1073, %v691
    %v1075 = vadd.f32 %v1074, %v692
    %v1076 = vadd.f32 %v1075, %v693
    %v1077 = vadd.f32 %v1076, %v694
    %v1078 = vadd.f32 %v1077, %v695
    %v1079 = vadd.f32 %v1078, %v696
    %v1080 = vadd.f32 %v1079, %v697
    %v1081 = vadd.f32 %v1080, %v698
    %v1082 = vadd.f32 %v1081, %v699
    %v1083 = vadd.f32 %v1082, %v700
    %v1084 = vadd.f32 %v1083, %v701
    %v1085 = vadd.f32 %v1084, %v702
    %v1086 = vadd.f32 %v1085, %v703
    %v1087 = vadd.f32 %v1086, %v704
    %v1088 = vadd.f32 %v1087, %v705
    %v1089 = vadd.f32 %v1088, %v706
    %v1090 = vadd.f32 %v1089, %v707
    %v1091 = vadd.f32 %v1090, %v708
    %v1092 = vadd.f32 %v1091, %v709
    %v1093 = vadd.f32 %v1092, %v710
    %v1094 = vadd.f32 %v1093, %v711
    %v1095 = vadd.f32 %v1094, %v712
    %v1096 = vadd.f32 %v1095, %v713
    %v1097 = vadd.f32 %v1096, %v714
    %v1098 = vadd.f32 %v1097, %v715
    %v1099 = vadd.f32 %v1098, %v716
    %v1100 = vrot.slane %v1099, 4
    %v1101 = vadd.f32 %v1099, %v1100
    %v1102 = vrot.slane %v1101, 2
    %v1103 = vadd.f32 %v1101, %v1102
    %v1104 = vrot.slane %v1103, 1
    %v1105 = vadd.f32 %v1103, %v1104
    %v1106 = vmul.f32 %v653, %v653
    %v1107 = vmul.f32 %v654, %v654
    %v1108 = vmul.f32 %v655, %v655
    %v1109 = vmul.f32 %v656, %v656
    %v1110 = vmul.f32 %v657, %v657
    %v1111 = vmul.f32 %v658, %v658
    %v1112 = vmul.f32 %v659, %v659
    %v1113 = vmul.f32 %v660, %v660
    %v1114 = vmul.f32 %v661, %v661
    %v1115 = vmul.f32 %v662, %v662
    %v1116 = vmul.f32 %v663, %v663
    %v1117 = vmul.f32 %v664, %v664
    %v1118 = vmul.f32 %v665, %v665
    %v1119 = vmul.f32 %v666, %v666
    %v1120 = vmul.f32 %v667, %v667
    %v1121 = vmul.f32 %v668, %v668
    %v1122 = vmul.f32 %v669, %v669
    %v1123 = vmul.f32 %v670, %v670
    %v1124 = vmul.f32 %v671, %v671
    %v1125 = vmul.f32 %v672, %v672
    %v1126 = vmul.f32 %v673, %v673
    %v1127 = vmul.f32 %v674, %v674
    %v1128 = vmul.f32 %v675, %v675
    %v1129 = vmul.f32 %v676, %v676
    %v1130 = vmul.f32 %v677, %v677
    %v1131 = vmul.f32 %v678, %v678
    %v1132 = vmul.f32 %v679, %v679
    %v1133 = vmul.f32 %v680, %v680
    %v1134 = vmul.f32 %v681, %v681
    %v1135 = vmul.f32 %v682, %v682
    %v1136 = vmul.f32 %v683, %v683
    %v1137 = vmul.f32 %v684, %v684
    %v1138 = vmul.f32 %v685, %v685
    %v1139 = vmul.f32 %v686, %v686
    %v1140 = vmul.f32 %v687, %v687
    %v1141 = vmul.f32 %v688, %v688
    %v1142 = vmul.f32 %v689, %v689
    %v1143 = vmul.f32 %v690, %v690
    %v1144 = vmul.f32 %v691, %v691
    %v1145 = vmul.f32 %v692, %v692
    %v1146 = vmul.f32 %v693, %v693
    %v1147 = vmul.f32 %v694, %v694
    %v1148 = vmul.f32 %v695, %v695
    %v1149 = vmul.f32 %v696, %v696
    %v1150 = vmul.f32 %v697, %v697
    %v1151 = vmul.f32 %v698, %v698
    %v1152 = vmul.f32 %v699, %v699
    %v1153 = vmul.f32 %v700, %v700
    %v1154 = vmul.f32 %v701, %v701
    %v1155 = vmul.f32 %v702, %v702
    %v1156 = vmul.f32 %v703, %v703
    %v1157 = vmul.f32 %v704, %v704
    %v1158 = vmul.f32 %v705, %v705
    %v1159 = vmul.f32 %v706, %v706
    %v1160 = vmul.f32 %v707, %v707
    %v1161 = vmul.f32 %v708, %v708
    %v1162 = vmul.f32 %v709, %v709
    %v1163 = vmul.f32 %v710, %v710
    %v1164 = vmul.f32 %v711, %v711
    %v1165 = vmul.f32 %v712, %v712
    %v1166 = vmul.f32 %v713, %v713
    %v1167 = vmul.f32 %v714, %v714
    %v1168 = vmul.f32 %v715, %v715
    %v1169 = vmul.f32 %v716, %v716
    %v1170 = vadd.f32 %v1106, %v1107
    %v1171 = vadd.f32 %v1170, %v1108
    %v1172 = vadd.f32 %v1171, %v1109
    %v1173 = vadd.f32 %v1172, %v1110
    %v1174 = vadd.f32 %v1173, %v1111
    %v1175 = vadd.f32 %v1174, %v1112
    %v1176 = vadd.f32 %v1175, %v1113
    %v1177 = vadd.f32 %v1176, %v1114
    %v1178 = vadd.f32 %v1177, %v1115
    %v1179 = vadd.f32 %v1178, %v1116
    %v1180 = vadd.f32 %v1179, %v1117
    %v1181 = vadd.f32 %v1180, %v1118
    %v1182 = vadd.f32 %v1181, %v1119
    %v1183 = vadd.f32 %v1182, %v1120
    %v1184 = vadd.f32 %v1183, %v1121
    %v1185 = vadd.f32 %v1184, %v1122
    %v1186 = vadd.f32 %v1185, %v1123
    %v1187 = vadd.f32 %v1186, %v1124
    %v1188 = vadd.f32 %v1187, %v1125
    %v1189 = vadd.f32 %v1188, %v1126
    %v1190 = vadd.f32 %v1189, %v1127
    %v1191 = vadd.f32 %v1190, %v1128
    %v1192 = vadd.f32 %v1191, %v1129
    %v1193 = vadd.f32 %v1192, %v1130
    %v1194 = vadd.f32 %v1193, %v1131
    %v1195 = vadd.f32 %v1194, %v1132
    %v1196 = vadd.f32 %v1195, %v1133
    %v1197 = vadd.f32 %v1196, %v1134
    %v1198 = vadd.f32 %v1197, %v1135
    %v1199 = vadd.f32 %v1198, %v1136
    %v1200 = vadd.f32 %v1199, %v1137
    %v1201 = vadd.f32 %v1200, %v1138
    %v1202 = vadd.f32 %v1201, %v1139
    %v1203 = vadd.f32 %v1202, %v1140
    %v1204 = vadd.f32 %v1203, %v1141
    %v1205 = vadd.f32 %v1204, %v1142
    %v1206 = vadd.f32 %v1205, %v1143
    %v1207 = vadd.f32 %v1206, %v1144
    %v1208 = vadd.f32 %v1207, %v1145
    %v1209 = vadd.f32 %v1208, %v1146
    %v1210 = vadd.f32 %v1209, %v1147
    %v1211 = vadd.f32 %v1210, %v1148
    %v1212 = vadd.f32 %v1211, %v1149
    %v1213 = vadd.f32 %v1212, %v1150
    %v1214 = vadd.f32 %v1213, %v1151
    %v1215 = vadd.f32 %v1214, %v1152
    %v1216 = vadd.f32 %v1215, %v1153
    %v1217 = vadd.f32 %v1216, %v1154
    %v1218 = vadd.f32 %v1217, %v1155
    %v1219 = vadd.f32 %v1218, %v1156
    %v1220 = vadd.f32 %v1219, %v1157
    %v1221 = vadd.f32 %v1220, %v1158
    %v1222 = vadd.f32 %v1221, %v1159
    %v1223 = vadd.f32 %v1222, %v1160
    %v1224 = vadd.f32 %v1223, %v1161
    %v1225 = vadd.f32 %v1224, %v1162
    %v1226 = vadd.f32 %v1225, %v1163
    %v1227 = vadd.f32 %v1226, %v1164
    %v1228 = vadd.f32 %v1227, %v1165
    %v1229 = vadd.f32 %v1228, %v1166
    %v1230 = vadd.f32 %v1229, %v1167
    %v1231 = vadd.f32 %v1230, %v1168
    %v1232 = vadd.f32 %v1231, %v1169
    %v1233 = vrot.slane %v1232, 4
    %v1234 = vadd.f32 %v1232, %v1233
    %v1235 = vrot.slane %v1234, 2
    %v1236 = vadd.f32 %v1234, %v1235
    %v1237 = vrot.slane %v1236, 1
    %v1238 = vadd.f32 %v1236, %v1237
    %vm1239 = vcmask 1040384
    %v1240 = vsel %vm1239, %v1105, %v1238
    %1241 = vst [vmem:[#allocation8] sm:$0x3] %v1240
    // Predicated region
    $region18: #{tpu_custom_call.1} parent=1 // pred_check
      _
    $region19: #{tpu_custom_call.1} parent=1 // pred_check_branch
      %1243 = sbr.rel (0) target = $region21
    $region20: #{tpu_custom_call.1} parent=1 // pred_region
      %s1245 = ssub.s32 4096, 4096
      %1246 = vsyncadd [#allocation4], %s1245
      %s1247 = sshll.u32 [#allocation7], 4
      %s1248 = int_to_ptr.vmem [resolvable:$true] %s1247
      %1253 = dma.vmem_to_hbm [thread:$0]  %s1248, 4096, %s2, [#allocation4], 64, 64, 4
    $region21: #{tpu_custom_call.1} parent=1 // pred_fallthru
      _
    // Predicated region
    $region22: #{tpu_custom_call.1} parent=1 // pred_check
      _
    $region23: #{tpu_custom_call.1} parent=1 // pred_check_branch
      %1255 = sbr.rel (0) target = $region25
    $region24: #{tpu_custom_call.1} parent=1 // pred_region
      %s1257 = ssub.s32 32, 32
      %1258 = vsyncadd [#allocation9], %s1257
      %s1260 = sshll.u32 [#allocation8], 4
      %s1261 = int_to_ptr.vmem [resolvable:$true] %s1260
      %1263 = dma.vmem_to_hbm [thread:$0]  %s1261, 32, %s3, [#allocation9]
    $region25: #{tpu_custom_call.1} parent=1 // pred_fallthru
      _
    // Predicated region
    $region26: #{tpu_custom_call.1} parent=1 // pred_check
      _
    $region27: #{tpu_custom_call.1} parent=1 // pred_check_branch
      %1265 = sbr.rel (0) target = $region29
    $region28: #{tpu_custom_call.1} parent=1 // pred_region
      %1266 = dma.done [#allocation4], 4096
    $region29: #{tpu_custom_call.1} parent=1 // pred_fallthru
      _
    // Predicated region
    $region30: #{tpu_custom_call.1} parent=1 // pred_check
      _
    $region31: #{tpu_custom_call.1} parent=1 // pred_check_branch
      %1268 = sbr.rel (0) target = $region33
    $region32: #{tpu_custom_call.1} parent=1 // pred_region
      %1269 = dma.done [#allocation9], 32
    $region33: #{tpu_custom_call.1} parent=1 // pred_fallthru
      _
    %1270 = vsyncpa [#allocation3], 1
    %1271 = vsyncpa [#allocation6], 1
    %1272 = vsyncpa [#allocation4], 1
    %1273 = vsyncpa [#allocation9], 1

</llo_original>
